<compile_context>
chip_gen: v5e
topology: v5e:2x2
jax: 0.10.0
libtpu: 0.0.40
codegen_flags: <defaults>
</compile_context>

<pallas_src>
import functools

import jax
import jax.numpy as jnp
from jax import lax
from jax.experimental import pallas as pl
from jax.experimental.pallas import tpu as pltpu


# dot_general dimension numbers (same convention as the pallas flash-attention ops).
_TN = (((0,), (0,)), ((), ()))   # contract dim-0 of both operands (lhs "transposed")
_NT = (((1,), (1,)), ((), ()))   # contract dim-1 of both operands (rhs "transposed")


def _mhsa_kernel(x_ref, w_ref, o_ref, *, bt, head_ch, n_valid, n_pad,
                 compute_dtype, exp_dtype):
    """One (batch-tile, head) grid step, tokens-on-lanes.

    x_ref : (Bt, Cin+1, Np)   input feature map + ones bias row, Np = padded H*W
    w_ref : (1, 3*Ch, Cin+1)  this head's packed [q;k;v] 1x1-conv weights (bias folded)
    o_ref : (Bt, 1, Ch, Np)   this head's outputs, channels on sublanes / tokens on lanes
    """
    w_h = w_ref[0]                                               # (3Ch, Cin+1), compute_dtype

    # Key mask for token padding (dormant when H*W is already a multiple of 128).
    if n_valid < n_pad:
        col = lax.broadcasted_iota(jnp.int32, (1, n_pad), 1)
        key_bias = jnp.where(col < n_valid, 0.0, -jnp.inf).astype(jnp.float32)
    else:
        key_bias = None

    ones_row = jnp.ones((1, n_pad), dtype=compute_dtype)         # hoisted broadcast

    @pl.loop(0, bt)                                              # bounds live ranges per element
    def _(bi):
        x_t = x_ref[bi, :, :].astype(compute_dtype)              # (Cin+1, Np)

        # Fused q/k/v projection for this head; bias comes from the ones row in x.
        qkv = jnp.dot(w_h, x_t, preferred_element_type=jnp.float32)   # (3Ch, Np) f32

        q_t = qkv[0 * head_ch:1 * head_ch, :]                    # (Ch, Np)
        k_t = qkv[1 * head_ch:2 * head_ch, :]                    # (Ch, Np)
        v_t = qkv[2 * head_ch:3 * head_ch, :]                    # (Ch, Np)

        # energy[i, j] = sum_c q_t[c, i] * k_t[c, j]  -> (N_q, N_k), keys on lanes.
        e = lax.dot_general(q_t.astype(compute_dtype), k_t.astype(compute_dtype),
                            _TN, preferred_element_type=jnp.float32)
        if key_bias is not None:
            e = e + key_bias
        e = e - jnp.max(e, axis=-1, keepdims=True)
        p = jnp.exp(e.astype(exp_dtype))                         # (N_q, N_k)
        p_mm = p if p.dtype == compute_dtype else p.astype(compute_dtype)

        # PV (unnormalized) and the softmax denominator as a second 1-row MXU push
        # (no sublane-misaligned concat of a ones row onto V).
        out_h = lax.dot_general(v_t.astype(compute_dtype), p_mm, _NT,
                                preferred_element_type=jnp.float32)   # (Ch, N_q)
        denom = lax.dot_general(ones_row, p_mm, _NT,
                                preferred_element_type=jnp.float32)   # (1, N_q)

        inv = pl.reciprocal(denom, approx=True)                  # (1, N_q)
        o_ref[bi, 0, :, :] = (out_h * inv).astype(o_ref.dtype)


def _largest_divisor_leq(n, cap):
    for d in range(min(n, cap), 0, -1):
        if n % d == 0:
            return d
    return 1


def multi_head_self_attention_2d(x_nchw, wq, bq, wk, bk, wv, bv, *,
                                 compute_dtype=jnp.bfloat16,
                                 exp_dtype=jnp.float32,
                                 batch_tile=8):
    """x_nchw: (B, Cin, H, W); weights: (nh, Cin, Ch); biases: (nh, 1, Ch).

    Returns (B, n_heads, Ch, H, W), matching the PyTorch module's output for a
    4-D input with n_heads > 1, residual=False.

    compute_dtype: MXU operand dtype (f32 accumulation); bfloat16 by default.
    exp_dtype: dtype of the softmax exp; set jnp.bfloat16 on v6e/v7x for the
               bf16 EUP path (keep float32 on v5e).
    """
    B, Cin, H, W = x_nchw.shape
    nh, _, Ch = wq.shape
    n_valid = H * W
    n_pad = ((n_valid + 127) // 128) * 128        # lane-dense token axis

    # Tokens-on-lanes layout (pure reshape of NCHW), padded token axis, plus a
    # ones row so the conv bias folds into the projection contraction.
    x_t = x_nchw.reshape(B, Cin, n_valid)
    if n_pad != n_valid:
        x_t = jnp.pad(x_t, ((0, 0), (0, 0), (0, n_pad - n_valid)))
    x_aug = jnp.concatenate(
        [x_t, jnp.ones((B, 1, n_pad), dtype=x_t.dtype)], axis=1)        # (B, Cin+1, Np)

    # Per-head packed [q; k; v] projection rows; last column is the bias.
    # Row c of head h corresponds to torch {q,k,v}_conv.weight[h*Ch + c, :, 0, 0].
    def _pack(w, b):   # (nh, Cin, Ch), (nh, 1, Ch) -> (nh, Ch, Cin+1)
        return jnp.concatenate(
            [jnp.transpose(w, (0, 2, 1)), jnp.transpose(b, (0, 2, 1))], axis=-1)

    w_pack = jnp.concatenate([_pack(wq, bq), _pack(wk, bk), _pack(wv, bv)],
                             axis=1).astype(compute_dtype)               # (nh, 3Ch, Cin+1)

    bt = _largest_divisor_leq(B, batch_tile)      # batch elements per grid step
    grid = (B // bt, nh)

    kernel = functools.partial(_mhsa_kernel, bt=bt, head_ch=Ch,
                               n_valid=n_valid, n_pad=n_pad,
                               compute_dtype=compute_dtype, exp_dtype=exp_dtype)

    itemsize = jnp.dtype(x_nchw.dtype).itemsize
    cbytes = jnp.dtype(compute_dtype).itemsize
    ebytes = jnp.dtype(exp_dtype).itemsize

    # Scoped VMEM sized from actual blocks (double-buffered) + per-element intermediates.
    block_bytes = 2 * (bt * (Cin + 1) * n_pad * itemsize
                       + 3 * Ch * (Cin + 1) * cbytes
                       + bt * Ch * n_pad * itemsize)
    inter_bytes = n_pad * n_pad * (8 + ebytes + cbytes) + 3 * Ch * n_pad * 8
    vmem_limit = int(min(100 << 20,
                         max(32 << 20, 2 * (block_bytes + inter_bytes) + (4 << 20))))

    flops_per_bh = (2 * (3 * Ch) * (Cin + 1) * n_pad        # projection
                    + 2 * Ch * n_pad * n_pad                # QK^T
                    + 2 * Ch * n_pad * n_pad                # PV
                    + 2 * n_pad * n_pad)                    # denominator
    cost = pl.CostEstimate(
        flops=B * nh * flops_per_bh,
        transcendentals=B * nh * (n_pad * n_pad + n_pad),
        bytes_accessed=(B * (Cin + 1) * n_pad * itemsize
                        + nh * 3 * Ch * (Cin + 1) * cbytes
                        + B * nh * Ch * n_pad * itemsize))

    out = pl.pallas_call(
        kernel,
        out_shape=jax.ShapeDtypeStruct((B, nh, Ch, n_pad), x_nchw.dtype),
        grid=grid,
        in_specs=[
            # x block index is independent of the head axis -> resident across head steps.
            pl.BlockSpec((bt, Cin + 1, n_pad), lambda b, h: (b, 0, 0)),
            pl.BlockSpec((1, 3 * Ch, Cin + 1), lambda b, h: (h, 0, 0)),
        ],
        out_specs=pl.BlockSpec((bt, 1, Ch, n_pad), lambda b, h: (b, h, 0, 0)),
        compiler_params=pltpu.CompilerParams(
            dimension_semantics=("parallel", "parallel"),
            vmem_limit_bytes=vmem_limit),
        cost_estimate=cost,
    )(x_aug, w_pack)

    # (B, nh, Ch, Np) -> trim token padding -> (B, nh, Ch, H, W): pure reshape,
    # kernel output is already channels-major / tokens-last.
    out = out[..., :n_valid]
    return out.reshape(B, nh, Ch, H, W)


def _reference(x_nchw, wq, bq, wk, bk, wv, bv):
    """Plain-JAX f32 reference of the same forward pass (for validation)."""
    B, Cin, H, W = x_nchw.shape
    nh, _, Ch = wq.shape
    xf = jnp.transpose(x_nchw, (0, 2, 3, 1)).reshape(B, H * W, Cin)
    q = jnp.einsum("bnc,hcd->bhnd", xf, wq) + bq[None]
    k = jnp.einsum("bnc,hcd->bhnd", xf, wk) + bk[None]
    v = jnp.einsum("bnc,hcd->bhnd", xf, wv) + bv[None]
    e = jnp.einsum("bhnd,bhmd->bhnm", q, k)
    a = jax.nn.softmax(e, axis=-1)
    o = jnp.einsum("bhnm,bhmd->bhnd", a, v)
    return jnp.transpose(o, (0, 1, 3, 2)).reshape(B, nh, Ch, H, W)


if __name__ == "__main__":
    # Module config: MultiHeadSelfAttention2d(in_channels=8, n_heads=2,
    #                                         residual=False, kernel_size=1,
    #                                         attention_type=0)
    B, Cin, H, W = 2, 8, 16, 16     # N = H*W = 256 -> lane-dense (2 x 128)
    n_heads = 2
    Ch = Cin                        # out_channels=None -> per-head channels == in_channels

    key = jax.random.PRNGKey(0)
    kx, kq, kbq, kk, kbk, kv, kbv = jax.random.split(key, 7)

    x = jax.random.normal(kx, (B, Cin, H, W), dtype=jnp.float32)

    # Deterministic synthetic conv parameters.
    # wq[h, ci, c] corresponds to torch query_conv.weight[h*Ch + c, ci, 0, 0];
    # bq[h, 0, c]  corresponds to torch query_conv.bias[h*Ch + c]; likewise k/v.
    scale = 0.1
    wq = scale * jax.random.normal(kq, (n_heads, Cin, Ch), dtype=jnp.float32)
    bq = scale * jax.random.normal(kbq, (n_heads, 1, Ch), dtype=jnp.float32)
    wk = scale * jax.random.normal(kk, (n_heads, Cin, Ch), dtype=jnp.float32)
    bk = scale * jax.random.normal(kbk, (n_heads, 1, Ch), dtype=jnp.float32)
    wv = scale * jax.random.normal(kv, (n_heads, Cin, Ch), dtype=jnp.float32)
    bv = scale * jax.random.normal(kbv, (n_heads, 1, Ch), dtype=jnp.float32)

    # Default path: bf16 MXU operands / f32 accumulation / f32 exp.
    out = multi_head_self_attention_2d(x, wq, bq, wk, bk, wv, bv)
    out = jax.block_until_ready(out)

    ref = jax.block_until_ready(_reference(x, wq, bq, wk, bk, wv, bv))

    assert out.shape == (B, n_heads, Ch, H, W), out.shape
    # Documented tolerance for bf16 MXU operands + approx reciprocal (use
    # compute_dtype=jnp.float32 for ~1e-6 parity with the f32 reference).
    assert jnp.allclose(out, ref, rtol=5e-3, atol=5e-3), (
        float(jnp.max(jnp.abs(out - ref))))

    print("KERNEL_OK")
</pallas_src>

<mosaic_0001>
module attributes {stable_mosaic.version = 11 : i64} {
  func.func @_mhsa_kernel(%arg0: i32, %arg1: i32, %arg2: memref<2x9x256xf32, #tpu.memory_space<vmem>>, %arg3: memref<1x24x9xbf16, #tpu.memory_space<vmem>>, %arg4: memref<2x1x8x256xf32, #tpu.memory_space<vmem>>) attributes {dimension_semantics = [#tpu.dimension_semantics<parallel>, #tpu.dimension_semantics<parallel>], iteration_bounds = array<i64: 1, 2>, scalar_prefetch = 0 : i64, scratch_operands = 0 : i64, tpu.core_type = #tpu.core_type<tc>, window_params = [{transform_indices = @transform_0, window_bounds = array<i64: 2, 9, 256>}, {transform_indices = @transform_1, window_bounds = array<i64: 1, 24, 9>}, {transform_indices = @transform_2, window_bounds = array<i64: 2, 1, 8, 256>}]} {
    %c0 = arith.constant 0 : index
    %c0_0 = arith.constant 0 : index
    %c0_1 = arith.constant 0 : index
    %0 = vector.load %arg3[%c0, %c0_0, %c0_1] : memref<1x24x9xbf16, #tpu.memory_space<vmem>>, vector<1x24x9xbf16>
    %1 = vector.shape_cast %0 : vector<1x24x9xbf16> to vector<24x9xbf16>
    %cst = arith.constant 1.000000e+00 : bf16
    %2 = vector.broadcast %cst : bf16 to vector<1x256xbf16>
    %c0_i32 = arith.constant 0 : i32
    %c2_i32 = arith.constant 2 : i32
    %3 = arith.addi %c0_i32, %c2_i32 : i32
    %c1_i32 = arith.constant 1 : i32
    scf.for %arg5 = %c0_i32 to %3 step %c1_i32  : i32 {
      %c1_i32_3 = arith.constant 1 : i32
      %4 = arith.muli %arg5, %c1_i32_3 : i32
      %c0_i32_4 = arith.constant 0 : i32
      %5 = arith.addi %c0_i32_4, %4 : i32
      %6 = arith.index_cast %5 : i32 to index
      %c0_5 = arith.constant 0 : index
      %c0_6 = arith.constant 0 : index
      %7 = vector.load %arg2[%6, %c0_5, %c0_6] : memref<2x9x256xf32, #tpu.memory_space<vmem>>, vector<1x9x256xf32>
      %8 = vector.shape_cast %7 : vector<1x9x256xf32> to vector<9x256xf32>
      %9 = arith.truncf %8 : vector<9x256xf32> to vector<9x256xbf16>
      %cst_7 = arith.constant dense<0.000000e+00> : vector<24x256xf32>
      %10 = tpu.matmul %1, %9, %cst_7 {dimension_numbers = #tpu.dot_dimension_numbers<[1], [0], [0], [1], [0, 0, 1, 1], [], []>} : vector<24x9xbf16>, vector<9x256xbf16>, vector<24x256xf32> -> vector<24x256xf32>
      %11 = vector.extract_strided_slice %10 {offsets = [0, 0], sizes = [8, 256], strides = [1, 1]} : vector<24x256xf32> to vector<8x256xf32>
      %12 = vector.extract_strided_slice %10 {offsets = [8, 0], sizes = [8, 256], strides = [1, 1]} : vector<24x256xf32> to vector<8x256xf32>
      %13 = vector.extract_strided_slice %10 {offsets = [16, 0], sizes = [8, 256], strides = [1, 1]} : vector<24x256xf32> to vector<8x256xf32>
      %14 = arith.truncf %11 : vector<8x256xf32> to vector<8x256xbf16>
      %15 = arith.truncf %12 : vector<8x256xf32> to vector<8x256xbf16>
      %cst_8 = arith.constant dense<0.000000e+00> : vector<256x256xf32>
      %16 = tpu.matmul %14, %15, %cst_8 {dimension_numbers = #tpu.dot_dimension_numbers<[0], [0], [1], [1], [0, 1, 1, 1], [], []>} : vector<8x256xbf16>, vector<8x256xbf16>, vector<256x256xf32> -> vector<256x256xf32>
      %cst_9 = arith.constant dense<0xFF800000> : vector<256xf32>
      %17 = vector.multi_reduction <maximumf>, %16, %cst_9 [1] : vector<256x256xf32> to vector<256xf32>
      %18 = vector.shape_cast %17 : vector<256xf32> to vector<256x1xf32>
      %19 = vector.broadcast %18 : vector<256x1xf32> to vector<256x256xf32>
      %20 = arith.subf %16, %19 : vector<256x256xf32>
      %21 = math.exp %20 : vector<256x256xf32>
      %22 = arith.truncf %21 : vector<256x256xf32> to vector<256x256xbf16>
      %23 = arith.truncf %13 : vector<8x256xf32> to vector<8x256xbf16>
      %cst_10 = arith.constant dense<0.000000e+00> : vector<8x256xf32>
      %24 = tpu.matmul %23, %22, %cst_10 {dimension_numbers = #tpu.dot_dimension_numbers<[1], [1], [0], [0], [0, 0, 1, 0], [], []>} : vector<8x256xbf16>, vector<256x256xbf16>, vector<8x256xf32> -> vector<8x256xf32>
      %cst_11 = arith.constant dense<0.000000e+00> : vector<1x256xf32>
      %25 = tpu.matmul %2, %22, %cst_11 {dimension_numbers = #tpu.dot_dimension_numbers<[1], [1], [0], [0], [0, 0, 1, 0], [], []>} : vector<1x256xbf16>, vector<256x256xbf16>, vector<1x256xf32> -> vector<1x256xf32>
      %26 = tpu.reciprocal %25 {approx = true} : vector<1x256xf32> -> vector<1x256xf32>
      %27 = vector.broadcast %26 : vector<1x256xf32> to vector<8x256xf32>
      %28 = arith.mulf %24, %27 : vector<8x256xf32>
      %29 = arith.index_cast %5 : i32 to index
      %c0_12 = arith.constant 0 : index
      %c0_13 = arith.constant 0 : index
      %c0_14 = arith.constant 0 : index
      %30 = vector.load %arg4[%29, %c0_12, %c0_13, %c0_14] : memref<2x1x8x256xf32, #tpu.memory_space<vmem>>, vector<1x1x8x256xf32>
      %31 = vector.shape_cast %30 : vector<1x1x8x256xf32> to vector<8x256xf32>
      %32 = vector.shape_cast %28 : vector<8x256xf32> to vector<1x1x8x256xf32>
      tpu.vector_store %arg4[%29, %c0_12, %c0_13, %c0_14], %32 {strides = array<i32>} : memref<2x1x8x256xf32, #tpu.memory_space<vmem>>, vector<1x1x8x256xf32>,
    }
    %c2_i32_2 = arith.constant 2 : i32
    return
  }
  func.func @transform_0(%arg0: i32, %arg1: i32) -> (i32, i32, i32) {
    %c0_i32 = arith.constant 0 : i32
    %c0_i32_0 = arith.constant 0 : i32
    %c0_i32_1 = arith.constant 0 : i32
    return %arg0, %c0_i32, %c0_i32_0 : i32, i32, i32
  }
  func.func @transform_1(%arg0: i32, %arg1: i32) -> (i32, i32, i32) {
    %c0_i32 = arith.constant 0 : i32
    %c0_i32_0 = arith.constant 0 : i32
    %c0_i32_1 = arith.constant 0 : i32
    return %arg1, %c0_i32, %c0_i32_0 : i32, i32, i32
  }
  func.func @transform_2(%arg0: i32, %arg1: i32) -> (i32, i32, i32, i32) {
    %c0_i32 = arith.constant 0 : i32
    %c0_i32_0 = arith.constant 0 : i32
    %c0_i32_1 = arith.constant 0 : i32
    return %arg0, %arg1, %c0_i32, %c0_i32_0 : i32, i32, i32, i32
  }
}

</mosaic_0001>

<llo_original>
// kernel: tpu_custom_call.1
$region0: #{tpu_custom_call.1}
  #allocation0 [shape = 'u32[]', space=smem, size = 0x4, offset = 0x4, fixed_abs, tag = 'smem constant byte address 0x4 - core index']
  #allocation1 [shape = 'u32[72,128]{1,0:T(1,128)}', space=vmem, size = 0x9000, scoped, tag = 'internal scratch']
  %s0 = inlined_call_operand.vmem [shape: f32[2,9,256], index: 0, kind: input, shape index: {}]
  %s1 = inlined_call_operand.vmem [shape: bf16[2,24,9], index: 1, kind: input, shape index: {}]
  %s2 = inlined_call_operand.hbm [shape: f32[2,2,8,256], index: 2, kind: output, shape index: {}]
  %s3 = sld [smem:[#allocation0]]
  $region48: #{tpu_custom_call.1} parent=0
    _
  %s5 = ssub.s32 1, %s3
  %s6 = scalar_select 0, %s5, %s3
  $region1: #{tpu_custom_call.1} parent=0
    #allocation2 [shape = 'u8[32768]{0}', space=vmem, size = 0x8000, scoped, tag = 'output window, operand 0']
    #allocation3 [shape = 's32[2]{0}', space=sflag, size = 0x8, scoped, tag = 'scoped memory for tpu_custom_call.1']
    %7 = vsyncpa [#allocation3], 0
    %s8 = scalar_lea.sflag [#allocation3], 1
    %9 = vsyncpa %s8, 0
    loop: start=0, step=1, limit=4
    $region2: #{tpu_custom_call.1} parent=1 // loop_pre_header
      _
    $region3: #{tpu_custom_call.1} parent=1 // loop_header
      %s11 = sphi 0, %s15
      %p12 = scmp.ge.s32.totalorder %s11, 4
      %s18 = sphi 0, %s30
      %s19 = sphi 0, %s26
      %s20 = sphi 0, %s18
      %s21 = sphi 0, %s19
      %s22 = sphi 0, %s20
      %s23 = sphi 0, %s21
      %s33 = sphi 0, %s35
      %s36 = sphi 0, %s33
      %s37 = sphi 0, %s36
      %s53 = sphi 0, %s37
      %s59 = sphi 0, %s61
      %s62 = sphi 0, %s59
      %s63 = sphi 0, %s62
      %s79 = sphi 0, %s63
      %s87 = sphi 0, %s89
      %s90 = sphi 0, %s87
      %s91 = sphi 0, %s90
      %s107 = sphi 0, %s91
    $region4: #{tpu_custom_call.1} parent=1 // loop_header_branch
      %14 = sbr.rel (%p12) target = $region8
    $region5: #{tpu_custom_call.1} parent=1 // loop_body
      %s16 = ssub.s32 %s11, 1
      %s17 = ssub.s32 %s11, 2
      %s24 = sadd.s32 1, %s19
      %p25 = scmp.ge.s32.totalorder %s24, 2
      %s26 = scalar_select %p25, 0, %s24
      %s27 = sadd.s32 1, %s18
      %s28 = scalar_select %p25, %s27, %s18
      %p29 = scmp.ge.s32.totalorder %s28, 1
      %s30 = scalar_select %p29, 0, %s28
      %s31 = ssub.s32 %s18, %s30
      %p32 = scmp.eq.s32.totalorder %s31, 0
      %s34 = sadd.s32 %s33, 1
      %s35 = scalar_select %p32, %s33, %s34
      %p38 = pneg %p32
      %p39 = scmp.eq.s32.totalorder %s11, 1
      %p40 = por %p38, %p39
      %p41 = scmp.ne.s32.totalorder %s33, %s36
      %p42 = scmp.eq.s32.totalorder %s11, 0
      %p43 = por %p41, %p42
      %p44 = scmp.ne.s32.totalorder %s33, %s36
      %p45 = scmp.eq.s32.totalorder %s16, 1
      %p46 = por %p44, %p45
      %p47 = scmp.ne.s32.totalorder %s36, %s37
      %p48 = scmp.eq.s32.totalorder %s16, 0
      %p49 = por %p47, %p48
      %p50 = scmp.ne.s32.totalorder %s36, %s37
      %p51 = scmp.eq.s32.totalorder %s17, 1
      %p52 = por %p50, %p51
      %p54 = scmp.ne.s32.totalorder %s37, %s53
      %p55 = scmp.eq.s32.totalorder %s17, 0
      %p56 = por %p54, %p55
      %s57 = ssub.s32 %s19, %s26
      %p58 = scmp.eq.s32.totalorder %s57, 0
      %s60 = sadd.s32 %s59, 1
      %s61 = scalar_select %p58, %s59, %s60
      %p64 = pneg %p58
      %p65 = scmp.eq.s32.totalorder %s11, 1
      %p66 = por %p64, %p65
      %p67 = scmp.ne.s32.totalorder %s59, %s62
      %p68 = scmp.eq.s32.totalorder %s11, 0
      %p69 = por %p67, %p68
      %p70 = scmp.ne.s32.totalorder %s59, %s62
      %p71 = scmp.eq.s32.totalorder %s16, 1
      %p72 = por %p70, %p71
      %p73 = scmp.ne.s32.totalorder %s62, %s63
      %p74 = scmp.eq.s32.totalorder %s16, 0
      %p75 = por %p73, %p74
      %p76 = scmp.ne.s32.totalorder %s62, %s63
      %p77 = scmp.eq.s32.totalorder %s17, 1
      %p78 = por %p76, %p77
      %p80 = scmp.ne.s32.totalorder %s63, %s79
      %p81 = scmp.eq.s32.totalorder %s17, 0
      %p82 = por %p80, %p81
      %s83 = ssub.s32 %s18, %s30
      %s84 = ssub.s32 %s19, %s26
      %s85 = sor.u32 %s83, %s84
      %p86 = scmp.eq.s32.totalorder %s85, 0
      %s88 = sadd.s32 %s87, 1
      %s89 = scalar_select %p86, %s87, %s88
      %p92 = pneg %p86
      %p93 = scmp.eq.s32.totalorder %s11, 1
      %p94 = por %p92, %p93
      %p95 = scmp.ne.s32.totalorder %s87, %s90
      %p96 = scmp.eq.s32.totalorder %s11, 0
      %p97 = por %p95, %p96
      %p98 = scmp.ne.s32.totalorder %s87, %s90
      %p99 = scmp.eq.s32.totalorder %s16, 1
      %p100 = por %p98, %p99
      %p101 = scmp.ne.s32.totalorder %s90, %s91
      %p102 = scmp.eq.s32.totalorder %s16, 0
      %p103 = por %p101, %p102
      %p104 = scmp.ne.s32.totalorder %s90, %s91
      %p105 = scmp.eq.s32.totalorder %s17, 1
      %p106 = por %p104, %p105
      %p108 = scmp.ne.s32.totalorder %s91, %s107
      %p109 = scmp.eq.s32.totalorder %s17, 0
      %p110 = por %p108, %p109
      %p111 = scmp.le.s32.totalorder 1, %s11
      %p112 = scmp.lt.s32.totalorder %s11, 3
      %p113 = pnand %p111, %p112
      %p114 = pneg %p113
      // Predicated region
      $region9: #{tpu_custom_call.1} parent=5 // pred_check
        _
      $region10: #{tpu_custom_call.1} parent=5 // pred_check_branch
        %116 = sbr.rel (%p113) target = $region12
      $region11: #{tpu_custom_call.1} parent=5 // pred_region
        %s117 = ssub.s32 %s11, 1
        // Predicated region
        $region13: #{tpu_custom_call.1} parent=11 // pred_check
          %p118 = pneg %p49
        $region14: #{tpu_custom_call.1} parent=11 // pred_check_branch
          %120 = sbr.rel (%p118) target = $region16
        $region15: #{tpu_custom_call.1} parent=11 // pred_region
          %s121 = smul.u32 2, %s20
          %p122 = scmp.lt.s32.totalorder %s121, 1
          %s123 = scalar_select %p122, %s121, 1
          %s124 = smul.addr %s123, 4
          %s125 = smul.addr %s124, 8
          %s126 = scalar_lea.vmem %s0, %s125
          %s127 = smul.u32 2, %s20
        $region16: #{tpu_custom_call.1} parent=11 // pred_fallthru
          _
      $region12: #{tpu_custom_call.1} parent=5 // pred_fallthru
        _
      %p128 = scmp.lt.s32.totalorder %s11, 2
      // Predicated region
      $region17: #{tpu_custom_call.1} parent=5 // pred_check
        %p129 = pneg %p128
      $region18: #{tpu_custom_call.1} parent=5 // pred_check_branch
        %131 = sbr.rel (%p129) target = $region20
      $region19: #{tpu_custom_call.1} parent=5 // pred_region
        // Predicated region
        $region21: #{tpu_custom_call.1} parent=19 // pred_check
          %p132 = pneg %p69
        $region22: #{tpu_custom_call.1} parent=19 // pred_check_branch
          %134 = sbr.rel (%p132) target = $region24
        $region23: #{tpu_custom_call.1} parent=19 // pred_region
          %p135 = scmp.lt.s32.totalorder %s19, 1
          %s136 = scalar_select %p135, %s19, 1
          %s137 = smul.addr %s136, 3
          %s138 = smul.addr %s137, 4
          %s139 = scalar_lea.vmem %s1, %s138
        $region24: #{tpu_custom_call.1} parent=19 // pred_fallthru
          _
      $region20: #{tpu_custom_call.1} parent=5 // pred_fallthru
        _
      %p140 = scmp.le.s32.totalorder 1, %s11
      %p141 = scmp.lt.s32.totalorder %s11, 3
      %p142 = pnand %p140, %p141
      %p143 = pneg %p142
      // Predicated region
      $region25: #{tpu_custom_call.1} parent=5 // pred_check
        _
      $region26: #{tpu_custom_call.1} parent=5 // pred_check_branch
        %145 = sbr.rel (%p142) target = $region28
      $region27: #{tpu_custom_call.1} parent=5 // pred_region
        %s146 = ssub.s32 %s11, 1
        %s147 = smul.u32 2, %s20
        %p148 = scmp.lt.s32.totalorder %s147, 1
        %s149 = scalar_select %p148, %s147, 1
        %s150 = smul.addr %s149, 4
        %s151 = smul.addr %s150, 8
        %s152 = scalar_lea.vmem %s0, %s151
        %p153 = pneg %p49
        %p154 = pneg %p46
        %p155 = scmp.lt.s32.totalorder %s21, 1
        %s156 = scalar_select %p155, %s21, 1
        %s157 = smul.addr %s156, 3
        %s158 = smul.addr %s157, 4
        %s159 = scalar_lea.vmem %s1, %s158
        %p160 = pneg %p75
        %p161 = pneg %p72
        %p162 = pneg %p103
        %p163 = pneg %p100
        %s164 = sand.u32 %s90, 1
        %s165 = scalar_lea.sflag [#allocation3], %s164
        %s166 = sand.u32 %s90, 1
        %s167 = smul.addr %s166, 32
        %s168 = scalar_lea.vmem [#allocation2], %s167
        %s169 = smul.u32 2, %s20
        %p170 = scmp.lt.s32.totalorder %s169, 1
        %s171 = scalar_select %p170, %s169, 1
        %s172 = smul.addr %s171, 4
        %s173 = smul.addr %s172, 8
        %s174 = scalar_lea.vmem %s0, %s173
        %s175 = smul.u32 2, %s20
        %p176 = scmp.lt.s32.totalorder %s21, 1
        %s177 = scalar_select %p176, %s21, 1
        %s178 = smul.addr %s177, 3
        %s179 = smul.addr %s178, 4
        %s180 = scalar_lea.vmem %s1, %s179
        %s181 = smul.u32 2, %s20
        %v184 = vld [vmem:[%s180] sm:$0xf]
        %v185 = vld [vmem:[%s180 + $0x4] sm:$0xf]
        %v186 = vld [vmem:[%s180 + $0x8] sm:$0xf]
        loop: start=0, step=1, limit=2
        $region29: #{tpu_custom_call.1} parent=27 // loop_pre_header
          _
        $region30: #{tpu_custom_call.1} parent=27 // loop_header
          %s188 = sphi 0, %s192
          %p189 = scmp.ge.s32.totalorder %s188, 2
        $region31: #{tpu_custom_call.1} parent=27 // loop_header_branch
          %191 = sbr.rel (%p189) target = $region35
        $region32: #{tpu_custom_call.1} parent=27 // loop_body
          %s193 = smul.u32 %s188, 4
          %s194 = smul.addr %s193, 8
          %s195 = scalar_lea.vmem %s174, %s194
          %v196 = vld [vmem:[%s195] sm:$0xff]
          %v197 = vld [vmem:[%s195 + $0x8] sm:$0xff]
          %v198 = vld [vmem:[%s195 + $0x10] sm:$0x1]
          %v199 = vld [vmem:[%s195 + $0x18] sm:$0x1]
          %v200 = vpack.c.bf16 %v198, %v196
          %v201 = vpack.c.bf16 %v199, %v197
          %v205 = vunpack.c.l.b16 %v184
          %v206 = vunpack.c.l.b16 %v185
          %v207 = vunpack.c.l.b16 %v186
          %v208 = vpack.c.b16 %v206, %v205
          %v209 = vpack.c.b16 %v207, %v207
          %vm210 = vcmask 72704
          %v212 = vsel %vm210, %v208, 0
          %v215 = vsel %vm210, %v209, 0
          %vm217 = vcmask 1043456
          %vm218 = vcmask 1044480
          %v219 = vsel %vm217, 4294967295, 65535
          %v220 = vsel %vm218, %v219, 0
          %v222 = vand.u32 %v200, %v220
          %v225 = vand.u32 %v201, %v220
          %227 = vmatpush.bf16.msra.mxu0 0
          %228 = vmatpush.bf16.msra.mxu0 0
          %229 = vmatpush.bf16.msra.mxu0 0
          %230 = vmatpush.bf16.msra.mxu0 0
          %231 = vmatpush.bf16.msra.mxu0 0
          %232 = vmatpush.bf16.msra.mxu0 0
          %233 = vmatpush.bf16.msra.mxu0 0
          %234 = vmatpush.bf16.msra.mxu0 %v222
          %235 = vmatmul.bf16.gmra.mxu0 %v212
          %v236 = vpop.f32.mrf.mxu0
          %v237 = vadd.f32 0.0, %v236
          %v238 = vpop.f32.mrf.mxu0
          %v239 = vadd.f32 0.0, %v238
          %240 = vmatmul.bf16.gmra.mxu0 %v215
          %v241 = vpop.f32.mrf.mxu0
          %v242 = vadd.f32 0.0, %v241
          %v243 = vpop.f32.mrf.mxu0
          %244 = vdwg.mxu0
          %245 = vmatpush.bf16.msra.mxu0 0
          %246 = vmatpush.bf16.msra.mxu0 0
          %247 = vmatpush.bf16.msra.mxu0 0
          %248 = vmatpush.bf16.msra.mxu0 0
          %249 = vmatpush.bf16.msra.mxu0 0
          %250 = vmatpush.bf16.msra.mxu0 0
          %251 = vmatpush.bf16.msra.mxu0 0
          %252 = vmatpush.bf16.msra.mxu0 %v225
          %253 = vmatmul.bf16.gmra.mxu0 %v212
          %v254 = vpop.f32.mrf.mxu0
          %v255 = vadd.f32 0.0, %v254
          %v256 = vpop.f32.mrf.mxu0
          %v257 = vadd.f32 0.0, %v256
          %258 = vmatmul.bf16.gmra.mxu0 %v215
          %v259 = vpop.f32.mrf.mxu0
          %v260 = vadd.f32 0.0, %v259
          %v261 = vpop.f32.mrf.mxu0
          %262 = vdwg.mxu0
          %v263 = vpack.c.bf16 %v237, %v237
          %v264 = vpack.c.bf16 %v255, %v255
          %v265 = vpack.c.bf16 %v239, %v239
          %v266 = vpack.c.bf16 %v257, %v257
          %267 = vxpose.binary.xlu0.c.b16.start [1/16] %v264, %v263, 128
          %268 = vxpose.binary.xlu0.c.b16.cont [2/16] 0, 0, 128
          %269 = vxpose.binary.xlu0.c.b16.cont [3/16] 0, 0, 128
          %270 = vxpose.binary.xlu0.c.b16.cont [4/16] 0, 0, 128
          %271 = vxpose.binary.xlu0.c.b16.cont [5/16] 0, 0, 128
          %272 = vxpose.binary.xlu0.c.b16.cont [6/16] 0, 0, 128
          %273 = vxpose.binary.xlu0.c.b16.cont [7/16] 0, 0, 128
          %274 = vxpose.binary.xlu0.c.b16.end [8/16] 0, 0, 128
          %v275 = vpop.trf.xlu0
          %v276 = vpop.trf.xlu0
          %v277 = vpop.trf.xlu0
          %v278 = vpop.trf.xlu0
          %v279 = vpop.trf.xlu0
          %v280 = vpop.trf.xlu0
          %v281 = vpop.trf.xlu0
          %v282 = vpop.trf.xlu0
          %v283 = vpop.trf.xlu0
          %v284 = vpop.trf.xlu0
          %v285 = vpop.trf.xlu0
          %v286 = vpop.trf.xlu0
          %v287 = vpop.trf.xlu0
          %v288 = vpop.trf.xlu0
          %v289 = vpop.trf.xlu0
          %v290 = vpop.trf.xlu0
          %vm291 = vcmask 64512
          %v293 = vsel %vm291, %v275, 0
          %v296 = vsel %vm291, %v277, 0
          %v299 = vsel %vm291, %v279, 0
          %v302 = vsel %vm291, %v281, 0
          %v305 = vsel %vm291, %v283, 0
          %v308 = vsel %vm291, %v285, 0
          %v311 = vsel %vm291, %v287, 0
          %v314 = vsel %vm291, %v289, 0
          %v317 = vsel %vm291, %v276, 0
          %v320 = vsel %vm291, %v278, 0
          %v323 = vsel %vm291, %v280, 0
          %v326 = vsel %vm291, %v282, 0
          %v329 = vsel %vm291, %v284, 0
          %v332 = vsel %vm291, %v286, 0
          %v335 = vsel %vm291, %v288, 0
          %v338 = vsel %vm291, %v290, 0
          %v341 = vsel %vm217, %v265, 0
          %v344 = vsel %vm217, %v266, 0
          %346 = vmatpush.bf16.msra.mxu0 0
          %347 = vmatpush.bf16.msra.mxu0 0
          %348 = vmatpush.bf16.msra.mxu0 0
          %349 = vmatpush.bf16.msra.mxu0 0
          %350 = vmatpush.bf16.msra.mxu0 0
          %351 = vmatpush.bf16.msra.mxu0 0
          %352 = vmatpush.bf16.msra.mxu0 0
          %353 = vmatpush.bf16.msra.mxu0 %v341
          %354 = vmatmul.bf16.gmra.mxu0 %v293
          %v355 = vpop.f32.mrf.mxu0
          %v356 = vadd.f32 0.0, %v355
          %v357 = vpop.f32.mrf.mxu0
          %v358 = vadd.f32 0.0, %v357
          %359 = vmatmul.bf16.gmra.mxu0 %v296
          %v360 = vpop.f32.mrf.mxu0
          %v361 = vadd.f32 0.0, %v360
          %v362 = vpop.f32.mrf.mxu0
          %v363 = vadd.f32 0.0, %v362
          %364 = vmatmul.bf16.gmra.mxu0 %v299
          %v365 = vpop.f32.mrf.mxu0
          %v366 = vadd.f32 0.0, %v365
          %v367 = vpop.f32.mrf.mxu0
          %v368 = vadd.f32 0.0, %v367
          %369 = vmatmul.bf16.gmra.mxu0 %v302
          %v370 = vpop.f32.mrf.mxu0
          %v371 = vadd.f32 0.0, %v370
          %v372 = vpop.f32.mrf.mxu0
          %v373 = vadd.f32 0.0, %v372
          %374 = vmatmul.bf16.gmra.mxu0 %v305
          %v375 = vpop.f32.mrf.mxu0
          %v376 = vadd.f32 0.0, %v375
          %v377 = vpop.f32.mrf.mxu0
          %v378 = vadd.f32 0.0, %v377
          %379 = vmatmul.bf16.gmra.mxu0 %v308
          %v380 = vpop.f32.mrf.mxu0
          %v381 = vadd.f32 0.0, %v380
          %v382 = vpop.f32.mrf.mxu0
          %v383 = vadd.f32 0.0, %v382
          %384 = vmatmul.bf16.gmra.mxu0 %v311
          %v385 = vpop.f32.mrf.mxu0
          %v386 = vadd.f32 0.0, %v385
          %v387 = vpop.f32.mrf.mxu0
          %v388 = vadd.f32 0.0, %v387
          %389 = vmatmul.bf16.gmra.mxu0 %v314
          %v390 = vpop.f32.mrf.mxu0
          %v391 = vadd.f32 0.0, %v390
          %v392 = vpop.f32.mrf.mxu0
          %v393 = vadd.f32 0.0, %v392
          %394 = vmatmul.bf16.gmra.mxu0 %v317
          %v395 = vpop.f32.mrf.mxu0
          %v396 = vadd.f32 0.0, %v395
          %v397 = vpop.f32.mrf.mxu0
          %v398 = vadd.f32 0.0, %v397
          %399 = vmatmul.bf16.gmra.mxu0 %v320
          %v400 = vpop.f32.mrf.mxu0
          %v401 = vadd.f32 0.0, %v400
          %v402 = vpop.f32.mrf.mxu0
          %v403 = vadd.f32 0.0, %v402
          %404 = vmatmul.bf16.gmra.mxu0 %v323
          %v405 = vpop.f32.mrf.mxu0
          %v406 = vadd.f32 0.0, %v405
          %v407 = vpop.f32.mrf.mxu0
          %v408 = vadd.f32 0.0, %v407
          %409 = vmatmul.bf16.gmra.mxu0 %v326
          %v410 = vpop.f32.mrf.mxu0
          %v411 = vadd.f32 0.0, %v410
          %v412 = vpop.f32.mrf.mxu0
          %v413 = vadd.f32 0.0, %v412
          %414 = vmatmul.bf16.gmra.mxu0 %v329
          %v415 = vpop.f32.mrf.mxu0
          %v416 = vadd.f32 0.0, %v415
          %v417 = vpop.f32.mrf.mxu0
          %v418 = vadd.f32 0.0, %v417
          %419 = vmatmul.bf16.gmra.mxu0 %v332
          %v420 = vpop.f32.mrf.mxu0
          %v421 = vadd.f32 0.0, %v420
          %v422 = vpop.f32.mrf.mxu0
          %v423 = vadd.f32 0.0, %v422
          %424 = vmatmul.bf16.gmra.mxu0 %v335
          %v425 = vpop.f32.mrf.mxu0
          %v426 = vadd.f32 0.0, %v425
          %v427 = vpop.f32.mrf.mxu0
          %v428 = vadd.f32 0.0, %v427
          %429 = vmatmul.bf16.gmra.mxu0 %v338
          %v430 = vpop.f32.mrf.mxu0
          %v431 = vadd.f32 0.0, %v430
          %v432 = vpop.f32.mrf.mxu0
          %v433 = vadd.f32 0.0, %v432
          %434 = vdwg.mxu0
          %435 = vmatpush.bf16.msra.mxu0 0
          %436 = vmatpush.bf16.msra.mxu0 0
          %437 = vmatpush.bf16.msra.mxu0 0
          %438 = vmatpush.bf16.msra.mxu0 0
          %439 = vmatpush.bf16.msra.mxu0 0
          %440 = vmatpush.bf16.msra.mxu0 0
          %441 = vmatpush.bf16.msra.mxu0 0
          %442 = vmatpush.bf16.msra.mxu0 %v344
          %443 = vmatmul.bf16.gmra.mxu0 %v293
          %v444 = vpop.f32.mrf.mxu0
          %v445 = vadd.f32 0.0, %v444
          %v446 = vpop.f32.mrf.mxu0
          %v447 = vadd.f32 0.0, %v446
          %448 = vmatmul.bf16.gmra.mxu0 %v296
          %v449 = vpop.f32.mrf.mxu0
          %v450 = vadd.f32 0.0, %v449
          %v451 = vpop.f32.mrf.mxu0
          %v452 = vadd.f32 0.0, %v451
          %453 = vmatmul.bf16.gmra.mxu0 %v299
          %v454 = vpop.f32.mrf.mxu0
          %v455 = vadd.f32 0.0, %v454
          %v456 = vpop.f32.mrf.mxu0
          %v457 = vadd.f32 0.0, %v456
          %458 = vmatmul.bf16.gmra.mxu0 %v302
          %v459 = vpop.f32.mrf.mxu0
          %v460 = vadd.f32 0.0, %v459
          %v461 = vpop.f32.mrf.mxu0
          %v462 = vadd.f32 0.0, %v461
          %463 = vmatmul.bf16.gmra.mxu0 %v305
          %v464 = vpop.f32.mrf.mxu0
          %v465 = vadd.f32 0.0, %v464
          %v466 = vpop.f32.mrf.mxu0
          %v467 = vadd.f32 0.0, %v466
          %468 = vmatmul.bf16.gmra.mxu0 %v308
          %v469 = vpop.f32.mrf.mxu0
          %v470 = vadd.f32 0.0, %v469
          %v471 = vpop.f32.mrf.mxu0
          %v472 = vadd.f32 0.0, %v471
          %473 = vmatmul.bf16.gmra.mxu0 %v311
          %v474 = vpop.f32.mrf.mxu0
          %v475 = vadd.f32 0.0, %v474
          %v476 = vpop.f32.mrf.mxu0
          %v477 = vadd.f32 0.0, %v476
          %478 = vmatmul.bf16.gmra.mxu0 %v314
          %v479 = vpop.f32.mrf.mxu0
          %v480 = vadd.f32 0.0, %v479
          %v481 = vpop.f32.mrf.mxu0
          %v482 = vadd.f32 0.0, %v481
          %483 = vmatmul.bf16.gmra.mxu0 %v317
          %v484 = vpop.f32.mrf.mxu0
          %v485 = vadd.f32 0.0, %v484
          %v486 = vpop.f32.mrf.mxu0
          %v487 = vadd.f32 0.0, %v486
          %488 = vmatmul.bf16.gmra.mxu0 %v320
          %v489 = vpop.f32.mrf.mxu0
          %v490 = vadd.f32 0.0, %v489
          %v491 = vpop.f32.mrf.mxu0
          %v492 = vadd.f32 0.0, %v491
          %493 = vmatmul.bf16.gmra.mxu0 %v323
          %v494 = vpop.f32.mrf.mxu0
          %v495 = vadd.f32 0.0, %v494
          %v496 = vpop.f32.mrf.mxu0
          %v497 = vadd.f32 0.0, %v496
          %498 = vmatmul.bf16.gmra.mxu0 %v326
          %v499 = vpop.f32.mrf.mxu0
          %v500 = vadd.f32 0.0, %v499
          %v501 = vpop.f32.mrf.mxu0
          %v502 = vadd.f32 0.0, %v501
          %503 = vmatmul.bf16.gmra.mxu0 %v329
          %v504 = vpop.f32.mrf.mxu0
          %v505 = vadd.f32 0.0, %v504
          %v506 = vpop.f32.mrf.mxu0
          %v507 = vadd.f32 0.0, %v506
          %508 = vmatmul.bf16.gmra.mxu0 %v332
          %v509 = vpop.f32.mrf.mxu0
          %v510 = vadd.f32 0.0, %v509
          %v511 = vpop.f32.mrf.mxu0
          %v512 = vadd.f32 0.0, %v511
          %513 = vmatmul.bf16.gmra.mxu0 %v335
          %v514 = vpop.f32.mrf.mxu0
          %v515 = vadd.f32 0.0, %v514
          %v516 = vpop.f32.mrf.mxu0
          %v517 = vadd.f32 0.0, %v516
          %518 = vmatmul.bf16.gmra.mxu0 %v338
          %v519 = vpop.f32.mrf.mxu0
          %v520 = vadd.f32 0.0, %v519
          %v521 = vpop.f32.mrf.mxu0
          %v522 = vadd.f32 0.0, %v521
          %523 = vdwg.mxu0
          %v524 = vmax.f32 %v356, %v445
          %525 = vmax.xlane.f32.xlu0 %v524
          %v526 = vpop.xlane.xlu0 %525
          %v527 = vmax.f32 %v358, %v447
          %528 = vmax.xlane.f32.xlu0 %v527
          %v529 = vpop.xlane.xlu0 %528
          %v530 = vmax.f32 %v361, %v450
          %531 = vmax.xlane.f32.xlu0 %v530
          %v532 = vpop.xlane.xlu0 %531
          %v533 = vmax.f32 %v363, %v452
          %534 = vmax.xlane.f32.xlu0 %v533
          %v535 = vpop.xlane.xlu0 %534
          %v536 = vmax.f32 %v366, %v455
          %537 = vmax.xlane.f32.xlu0 %v536
          %v538 = vpop.xlane.xlu0 %537
          %v539 = vmax.f32 %v368, %v457
          %540 = vmax.xlane.f32.xlu0 %v539
          %v541 = vpop.xlane.xlu0 %540
          %v542 = vmax.f32 %v371, %v460
          %543 = vmax.xlane.f32.xlu0 %v542
          %v544 = vpop.xlane.xlu0 %543
          %v545 = vmax.f32 %v373, %v462
          %546 = vmax.xlane.f32.xlu0 %v545
          %v547 = vpop.xlane.xlu0 %546
          %v548 = vmax.f32 %v376, %v465
          %549 = vmax.xlane.f32.xlu0 %v548
          %v550 = vpop.xlane.xlu0 %549
          %v551 = vmax.f32 %v378, %v467
          %552 = vmax.xlane.f32.xlu0 %v551
          %v553 = vpop.xlane.xlu0 %552
          %v554 = vmax.f32 %v381, %v470
          %555 = vmax.xlane.f32.xlu0 %v554
          %v556 = vpop.xlane.xlu0 %555
          %v557 = vmax.f32 %v383, %v472
          %558 = vmax.xlane.f32.xlu0 %v557
          %v559 = vpop.xlane.xlu0 %558
          %v560 = vmax.f32 %v386, %v475
          %561 = vmax.xlane.f32.xlu0 %v560
          %v562 = vpop.xlane.xlu0 %561
          %v563 = vmax.f32 %v388, %v477
          %564 = vmax.xlane.f32.xlu0 %v563
          %v565 = vpop.xlane.xlu0 %564
          %v566 = vmax.f32 %v391, %v480
          %567 = vmax.xlane.f32.xlu0 %v566
          %v568 = vpop.xlane.xlu0 %567
          %v569 = vmax.f32 %v393, %v482
          %570 = vmax.xlane.f32.xlu0 %v569
          %v571 = vpop.xlane.xlu0 %570
          %v572 = vmax.f32 %v396, %v485
          %573 = vmax.xlane.f32.xlu0 %v572
          %v574 = vpop.xlane.xlu0 %573
          %v575 = vmax.f32 %v398, %v487
          %576 = vmax.xlane.f32.xlu0 %v575
          %v577 = vpop.xlane.xlu0 %576
          %v578 = vmax.f32 %v401, %v490
          %579 = vmax.xlane.f32.xlu0 %v578
          %v580 = vpop.xlane.xlu0 %579
          %v581 = vmax.f32 %v403, %v492
          %582 = vmax.xlane.f32.xlu0 %v581
          %v583 = vpop.xlane.xlu0 %582
          %v584 = vmax.f32 %v406, %v495
          %585 = vmax.xlane.f32.xlu0 %v584
          %v586 = vpop.xlane.xlu0 %585
          %v587 = vmax.f32 %v408, %v497
          %588 = vmax.xlane.f32.xlu0 %v587
          %v589 = vpop.xlane.xlu0 %588
          %v590 = vmax.f32 %v411, %v500
          %591 = vmax.xlane.f32.xlu0 %v590
          %v592 = vpop.xlane.xlu0 %591
          %v593 = vmax.f32 %v413, %v502
          %594 = vmax.xlane.f32.xlu0 %v593
          %v595 = vpop.xlane.xlu0 %594
          %v596 = vmax.f32 %v416, %v505
          %597 = vmax.xlane.f32.xlu0 %v596
          %v598 = vpop.xlane.xlu0 %597
          %v599 = vmax.f32 %v418, %v507
          %600 = vmax.xlane.f32.xlu0 %v599
          %v601 = vpop.xlane.xlu0 %600
          %v602 = vmax.f32 %v421, %v510
          %603 = vmax.xlane.f32.xlu0 %v602
          %v604 = vpop.xlane.xlu0 %603
          %v605 = vmax.f32 %v423, %v512
          %606 = vmax.xlane.f32.xlu0 %v605
          %v607 = vpop.xlane.xlu0 %606
          %v608 = vmax.f32 %v426, %v515
          %609 = vmax.xlane.f32.xlu0 %v608
          %v610 = vpop.xlane.xlu0 %609
          %v611 = vmax.f32 %v428, %v517
          %612 = vmax.xlane.f32.xlu0 %v611
          %v613 = vpop.xlane.xlu0 %612
          %v614 = vmax.f32 %v431, %v520
          %615 = vmax.xlane.f32.xlu0 %v614
          %v616 = vpop.xlane.xlu0 %615
          %v617 = vmax.f32 %v433, %v522
          %618 = vmax.xlane.f32.xlu0 %v617
          %v619 = vpop.xlane.xlu0 %618
          %v620 = vsub.f32 %v356, %v526
          %v621 = vsub.f32 %v445, %v526
          %v622 = vsub.f32 %v358, %v529
          %v623 = vsub.f32 %v447, %v529
          %v624 = vsub.f32 %v361, %v532
          %v625 = vsub.f32 %v450, %v532
          %v626 = vsub.f32 %v363, %v535
          %v627 = vsub.f32 %v452, %v535
          %v628 = vsub.f32 %v366, %v538
          %v629 = vsub.f32 %v455, %v538
          %v630 = vsub.f32 %v368, %v541
          %v631 = vsub.f32 %v457, %v541
          %v632 = vsub.f32 %v371, %v544
          %v633 = vsub.f32 %v460, %v544
          %v634 = vsub.f32 %v373, %v547
          %v635 = vsub.f32 %v462, %v547
          %v636 = vsub.f32 %v376, %v550
          %v637 = vsub.f32 %v465, %v550
          %v638 = vsub.f32 %v378, %v553
          %v639 = vsub.f32 %v467, %v553
          %v640 = vsub.f32 %v381, %v556
          %v641 = vsub.f32 %v470, %v556
          %v642 = vsub.f32 %v383, %v559
          %v643 = vsub.f32 %v472, %v559
          %v644 = vsub.f32 %v386, %v562
          %v645 = vsub.f32 %v475, %v562
          %v646 = vsub.f32 %v388, %v565
          %v647 = vsub.f32 %v477, %v565
          %v648 = vsub.f32 %v391, %v568
          %v649 = vsub.f32 %v480, %v568
          %v650 = vsub.f32 %v393, %v571
          %v651 = vsub.f32 %v482, %v571
          %v652 = vsub.f32 %v396, %v574
          %v653 = vsub.f32 %v485, %v574
          %v654 = vsub.f32 %v398, %v577
          %v655 = vsub.f32 %v487, %v577
          %v656 = vsub.f32 %v401, %v580
          %v657 = vsub.f32 %v490, %v580
          %v658 = vsub.f32 %v403, %v583
          %v659 = vsub.f32 %v492, %v583
          %v660 = vsub.f32 %v406, %v586
          %v661 = vsub.f32 %v495, %v586
          %v662 = vsub.f32 %v408, %v589
          %v663 = vsub.f32 %v497, %v589
          %v664 = vsub.f32 %v411, %v592
          %v665 = vsub.f32 %v500, %v592
          %v666 = vsub.f32 %v413, %v595
          %v667 = vsub.f32 %v502, %v595
          %v668 = vsub.f32 %v416, %v598
          %v669 = vsub.f32 %v505, %v598
          %v670 = vsub.f32 %v418, %v601
          %v671 = vsub.f32 %v507, %v601
          %v672 = vsub.f32 %v421, %v604
          %v673 = vsub.f32 %v510, %v604
          %v674 = vsub.f32 %v423, %v607
          %v675 = vsub.f32 %v512, %v607
          %v676 = vsub.f32 %v426, %v610
          %v677 = vsub.f32 %v515, %v610
          %v678 = vsub.f32 %v428, %v613
          %v679 = vsub.f32 %v517, %v613
          %v680 = vsub.f32 %v431, %v616
          %v681 = vsub.f32 %v520, %v616
          %v682 = vsub.f32 %v433, %v619
          %v683 = vsub.f32 %v522, %v619
          %v684 = vmul.f32 %v620, 1.442695
          %v685 = vpow.pop %v684
          %v686 = vmul.f32 %v621, 1.442695
          %v687 = vpow.pop %v686
          %v688 = vmul.f32 %v622, 1.442695
          %v689 = vpow.pop %v688
          %v690 = vmul.f32 %v623, 1.442695
          %v691 = vpow.pop %v690
          %v692 = vmul.f32 %v624, 1.442695
          %v693 = vpow.pop %v692
          %v694 = vmul.f32 %v625, 1.442695
          %v695 = vpow.pop %v694
          %v696 = vmul.f32 %v626, 1.442695
          %v697 = vpow.pop %v696
          %v698 = vmul.f32 %v627, 1.442695
          %v699 = vpow.pop %v698
          %v700 = vmul.f32 %v628, 1.442695
          %v701 = vpow.pop %v700
          %v702 = vmul.f32 %v629, 1.442695
          %v703 = vpow.pop %v702
          %v704 = vmul.f32 %v630, 1.442695
          %v705 = vpow.pop %v704
          %v706 = vmul.f32 %v631, 1.442695
          %v707 = vpow.pop %v706
          %v708 = vmul.f32 %v632, 1.442695
          %v709 = vpow.pop %v708
          %v710 = vmul.f32 %v633, 1.442695
          %v711 = vpow.pop %v710
          %v712 = vmul.f32 %v634, 1.442695
          %v713 = vpow.pop %v712
          %v714 = vmul.f32 %v635, 1.442695
          %v715 = vpow.pop %v714
          %v716 = vmul.f32 %v636, 1.442695
          %v717 = vpow.pop %v716
          %v718 = vmul.f32 %v637, 1.442695
          %v719 = vpow.pop %v718
          %v720 = vmul.f32 %v638, 1.442695
          %v721 = vpow.pop %v720
          %v722 = vmul.f32 %v639, 1.442695
          %v723 = vpow.pop %v722
          %v724 = vmul.f32 %v640, 1.442695
          %v725 = vpow.pop %v724
          %v726 = vmul.f32 %v641, 1.442695
          %v727 = vpow.pop %v726
          %v728 = vmul.f32 %v642, 1.442695
          %v729 = vpow.pop %v728
          %v730 = vmul.f32 %v643, 1.442695
          %v731 = vpow.pop %v730
          %v732 = vmul.f32 %v644, 1.442695
          %v733 = vpow.pop %v732
          %v734 = vmul.f32 %v645, 1.442695
          %v735 = vpow.pop %v734
          %v736 = vmul.f32 %v646, 1.442695
          %v737 = vpow.pop %v736
          %v738 = vmul.f32 %v647, 1.442695
          %v739 = vpow.pop %v738
          %v740 = vmul.f32 %v648, 1.442695
          %v741 = vpow.pop %v740
          %v742 = vmul.f32 %v649, 1.442695
          %v743 = vpow.pop %v742
          %v744 = vmul.f32 %v650, 1.442695
          %v745 = vpow.pop %v744
          %v746 = vmul.f32 %v651, 1.442695
          %v747 = vpow.pop %v746
          %v748 = vmul.f32 %v652, 1.442695
          %v749 = vpow.pop %v748
          %v750 = vmul.f32 %v653, 1.442695
          %v751 = vpow.pop %v750
          %v752 = vmul.f32 %v654, 1.442695
          %v753 = vpow.pop %v752
          %v754 = vmul.f32 %v655, 1.442695
          %v755 = vpow.pop %v754
          %v756 = vmul.f32 %v656, 1.442695
          %v757 = vpow.pop %v756
          %v758 = vmul.f32 %v657, 1.442695
          %v759 = vpow.pop %v758
          %v760 = vmul.f32 %v658, 1.442695
          %v761 = vpow.pop %v760
          %v762 = vmul.f32 %v659, 1.442695
          %v763 = vpow.pop %v762
          %v764 = vmul.f32 %v660, 1.442695
          %v765 = vpow.pop %v764
          %v766 = vmul.f32 %v661, 1.442695
          %v767 = vpow.pop %v766
          %v768 = vmul.f32 %v662, 1.442695
          %v769 = vpow.pop %v768
          %v770 = vmul.f32 %v663, 1.442695
          %v771 = vpow.pop %v770
          %v772 = vmul.f32 %v664, 1.442695
          %v773 = vpow.pop %v772
          %v774 = vmul.f32 %v665, 1.442695
          %v775 = vpow.pop %v774
          %v776 = vmul.f32 %v666, 1.442695
          %v777 = vpow.pop %v776
          %v778 = vmul.f32 %v667, 1.442695
          %v779 = vpow.pop %v778
          %v780 = vmul.f32 %v668, 1.442695
          %v781 = vpow.pop %v780
          %v782 = vmul.f32 %v669, 1.442695
          %v783 = vpow.pop %v782
          %v784 = vmul.f32 %v670, 1.442695
          %v785 = vpow.pop %v784
          %v786 = vmul.f32 %v671, 1.442695
          %v787 = vpow.pop %v786
          %v788 = vmul.f32 %v672, 1.442695
          %v789 = vpow.pop %v788
          %v790 = vmul.f32 %v673, 1.442695
          %v791 = vpow.pop %v790
          %v792 = vmul.f32 %v674, 1.442695
          %v793 = vpow.pop %v792
          %v794 = vmul.f32 %v675, 1.442695
          %v795 = vpow.pop %v794
          %v796 = vmul.f32 %v676, 1.442695
          %v797 = vpow.pop %v796
          %v798 = vmul.f32 %v677, 1.442695
          %v799 = vpow.pop %v798
          %v800 = vmul.f32 %v678, 1.442695
          %v801 = vpow.pop %v800
          %v802 = vmul.f32 %v679, 1.442695
          %v803 = vpow.pop %v802
          %v804 = vmul.f32 %v680, 1.442695
          %v805 = vpow.pop %v804
          %v806 = vmul.f32 %v681, 1.442695
          %v807 = vpow.pop %v806
          %v808 = vmul.f32 %v682, 1.442695
          %v809 = vpow.pop %v808
          %v810 = vmul.f32 %v683, 1.442695
          %v811 = vpow.pop %v810
          %v812 = vpack.c.bf16 %v689, %v685
          %v813 = vpack.c.bf16 %v691, %v687
          %v814 = vpack.c.bf16 %v697, %v693
          %v815 = vpack.c.bf16 %v699, %v695
          %v816 = vpack.c.bf16 %v705, %v701
          %v817 = vpack.c.bf16 %v707, %v703
          %v818 = vpack.c.bf16 %v713, %v709
          %v819 = vpack.c.bf16 %v715, %v711
          %v820 = vpack.c.bf16 %v721, %v717
          %v821 = vpack.c.bf16 %v723, %v719
          %v822 = vpack.c.bf16 %v729, %v725
          %v823 = vpack.c.bf16 %v731, %v727
          %v824 = vpack.c.bf16 %v737, %v733
          %v825 = vpack.c.bf16 %v739, %v735
          %v826 = vpack.c.bf16 %v745, %v741
          %v827 = vpack.c.bf16 %v747, %v743
          %v828 = vpack.c.bf16 %v753, %v749
          %v829 = vpack.c.bf16 %v755, %v751
          %v830 = vpack.c.bf16 %v761, %v757
          %v831 = vpack.c.bf16 %v763, %v759
          %v832 = vpack.c.bf16 %v769, %v765
          %v833 = vpack.c.bf16 %v771, %v767
          %v834 = vpack.c.bf16 %v777, %v773
          %v835 = vpack.c.bf16 %v779, %v775
          %v836 = vpack.c.bf16 %v785, %v781
          %v837 = vpack.c.bf16 %v787, %v783
          %v838 = vpack.c.bf16 %v793, %v789
          %v839 = vpack.c.bf16 %v795, %v791
          %v840 = vpack.c.bf16 %v801, %v797
          %v841 = vpack.c.bf16 %v803, %v799
          %v842 = vpack.c.bf16 %v809, %v805
          %v843 = vpack.c.bf16 %v811, %v807
          %v844 = vpack.c.bf16 %v242, %v242
          %v845 = vpack.c.bf16 %v260, %v260
          %846 = vmatpush.bf16.xpose.msra.mxu0 %v826
          %847 = vmatpush.bf16.xpose.msra.mxu0 %v824
          %848 = vmatpush.bf16.xpose.msra.mxu0 %v822
          %849 = vmatpush.bf16.xpose.msra.mxu0 %v820
          %850 = vmatpush.bf16.xpose.msra.mxu0 %v818
          %851 = vmatpush.bf16.xpose.msra.mxu0 %v816
          %852 = vmatpush.bf16.xpose.msra.mxu0 %v814
          %853 = vmatpush.bf16.xpose.msra.mxu0 %v812
          %854 = vmatmul.bf16.gmra.mxu0 %v844
          %v855 = vpop.f32.mrf.mxu0
          %v856 = vadd.f32 0.0, %v855
          %v857 = vpop.f32.mrf.mxu0
          %858 = vdwg.mxu0
          %859 = vmatpush.bf16.xpose.msra.mxu0 %v827
          %860 = vmatpush.bf16.xpose.msra.mxu0 %v825
          %861 = vmatpush.bf16.xpose.msra.mxu0 %v823
          %862 = vmatpush.bf16.xpose.msra.mxu0 %v821
          %863 = vmatpush.bf16.xpose.msra.mxu0 %v819
          %864 = vmatpush.bf16.xpose.msra.mxu0 %v817
          %865 = vmatpush.bf16.xpose.msra.mxu0 %v815
          %866 = vmatpush.bf16.xpose.msra.mxu0 %v813
          %867 = vmatmul.bf16.gmra.mxu0 %v845
          %v868 = vpop.f32.mrf.mxu0
          %v869 = vadd.f32 %v856, %v868
          %v870 = vpop.f32.mrf.mxu0
          %871 = vdwg.mxu0
          %872 = vmatpush.bf16.xpose.msra.mxu0 %v842
          %873 = vmatpush.bf16.xpose.msra.mxu0 %v840
          %874 = vmatpush.bf16.xpose.msra.mxu0 %v838
          %875 = vmatpush.bf16.xpose.msra.mxu0 %v836
          %876 = vmatpush.bf16.xpose.msra.mxu0 %v834
          %877 = vmatpush.bf16.xpose.msra.mxu0 %v832
          %878 = vmatpush.bf16.xpose.msra.mxu0 %v830
          %879 = vmatpush.bf16.xpose.msra.mxu0 %v828
          %880 = vmatmul.bf16.gmra.mxu0 %v844
          %v881 = vpop.f32.mrf.mxu0
          %v882 = vadd.f32 0.0, %v881
          %v883 = vpop.f32.mrf.mxu0
          %884 = vdwg.mxu0
          %885 = vmatpush.bf16.xpose.msra.mxu0 %v843
          %886 = vmatpush.bf16.xpose.msra.mxu0 %v841
          %887 = vmatpush.bf16.xpose.msra.mxu0 %v839
          %888 = vmatpush.bf16.xpose.msra.mxu0 %v837
          %889 = vmatpush.bf16.xpose.msra.mxu0 %v835
          %890 = vmatpush.bf16.xpose.msra.mxu0 %v833
          %891 = vmatpush.bf16.xpose.msra.mxu0 %v831
          %892 = vmatpush.bf16.xpose.msra.mxu0 %v829
          %893 = vmatmul.bf16.gmra.mxu0 %v845
          %v894 = vpop.f32.mrf.mxu0
          %v895 = vadd.f32 %v882, %v894
          %v896 = vpop.f32.mrf.mxu0
          %897 = vdwg.mxu0
          %898 = vmatpush.bf16.xpose.msra.mxu0 %v826
          %899 = vmatpush.bf16.xpose.msra.mxu0 %v824
          %900 = vmatpush.bf16.xpose.msra.mxu0 %v822
          %901 = vmatpush.bf16.xpose.msra.mxu0 %v820
          %902 = vmatpush.bf16.xpose.msra.mxu0 %v818
          %903 = vmatpush.bf16.xpose.msra.mxu0 %v816
          %904 = vmatpush.bf16.xpose.msra.mxu0 %v814
          %905 = vmatpush.bf16.xpose.msra.mxu0 %v812
          %906 = vmatmul.bf16.gmra.mxu0 1065369472
          %v907 = vpop.f32.mrf.mxu0
          %v908 = vadd.f32 0.0, %v907
          %v909 = vpop.f32.mrf.mxu0
          %910 = vdwg.mxu0
          %911 = vmatpush.bf16.xpose.msra.mxu0 %v827
          %912 = vmatpush.bf16.xpose.msra.mxu0 %v825
          %913 = vmatpush.bf16.xpose.msra.mxu0 %v823
          %914 = vmatpush.bf16.xpose.msra.mxu0 %v821
          %915 = vmatpush.bf16.xpose.msra.mxu0 %v819
          %916 = vmatpush.bf16.xpose.msra.mxu0 %v817
          %917 = vmatpush.bf16.xpose.msra.mxu0 %v815
          %918 = vmatpush.bf16.xpose.msra.mxu0 %v813
          %919 = vmatmul.bf16.gmra.mxu0 1065369472
          %v920 = vpop.f32.mrf.mxu0
          %v921 = vadd.f32 %v908, %v920
          %v922 = vpop.f32.mrf.mxu0
          %923 = vdwg.mxu0
          %924 = vmatpush.bf16.xpose.msra.mxu0 %v842
          %925 = vmatpush.bf16.xpose.msra.mxu0 %v840
          %926 = vmatpush.bf16.xpose.msra.mxu0 %v838
          %927 = vmatpush.bf16.xpose.msra.mxu0 %v836
          %928 = vmatpush.bf16.xpose.msra.mxu0 %v834
          %929 = vmatpush.bf16.xpose.msra.mxu0 %v832
          %930 = vmatpush.bf16.xpose.msra.mxu0 %v830
          %931 = vmatpush.bf16.xpose.msra.mxu0 %v828
          %932 = vmatmul.bf16.gmra.mxu0 1065369472
          %v933 = vpop.f32.mrf.mxu0
          %v934 = vadd.f32 0.0, %v933
          %v935 = vpop.f32.mrf.mxu0
          %936 = vdwg.mxu0
          %937 = vmatpush.bf16.xpose.msra.mxu0 %v843
          %938 = vmatpush.bf16.xpose.msra.mxu0 %v841
          %939 = vmatpush.bf16.xpose.msra.mxu0 %v839
          %940 = vmatpush.bf16.xpose.msra.mxu0 %v837
          %941 = vmatpush.bf16.xpose.msra.mxu0 %v835
          %942 = vmatpush.bf16.xpose.msra.mxu0 %v833
          %943 = vmatpush.bf16.xpose.msra.mxu0 %v831
          %944 = vmatpush.bf16.xpose.msra.mxu0 %v829
          %945 = vmatmul.bf16.gmra.mxu0 1065369472
          %v946 = vpop.f32.mrf.mxu0
          %v947 = vadd.f32 %v934, %v946
          %v948 = vpop.f32.mrf.mxu0
          %949 = vdwg.mxu0
          %v950 = vrcp.pop %v921
          %v951 = vrcp.pop %v947
          %v952 = vperm.slane %v950, 0
          %v953 = vperm.slane %v951, 0
          %v954 = vmul.f32 %v869, %v952
          %v955 = vmul.f32 %v895, %v953
          %s956 = smul.u32 %s188, 2
          %s957 = smul.addr %s956, 8
          %s958 = scalar_lea.vmem %s168, %s957 [#allocation2]
          %959 = vst [vmem:[%s958] sm:$0xff] %v954
          %960 = vst [vmem:[%s958 + $0x8] sm:$0xff] %v955
        $region33: #{tpu_custom_call.1} parent=27 // loop_footer
          %s192 = sadd.s32 1, %s188
        $region34: #{tpu_custom_call.1} parent=27 // loop_footer_branch
          %187 = sbr.rel target = $region30
        $region35: #{tpu_custom_call.1} parent=27 // loop_exit
          _
        %s961 = sand.u32 %s90, 1
        %s962 = scalar_lea.sflag [#allocation3], %s961
        %s963 = sand.u32 %s90, 1
        %s964 = smul.addr %s963, 32
        %s965 = scalar_lea.vmem [#allocation2], %s964
        // Predicated region
        $region36: #{tpu_custom_call.1} parent=27 // pred_check
          %p966 = pneg %p100
        $region37: #{tpu_custom_call.1} parent=27 // pred_check_branch
          %968 = sbr.rel (%p966) target = $region39
        $region38: #{tpu_custom_call.1} parent=27 // pred_region
          %s969 = smul.u32 2, %s20
          %971 = vsyncadd %s962, 0
          %s972 = smul.addr %s21, 2
          %s973 = smul.addr %s969, 4
          %s974 = sadd.s32 %s972, %s973
          %s975 = smul.addr %s974, 8
          %s976 = scalar_lea.hbm %s2, %s975
          %s977 = sshll.u32 %s965, 4
          %s978 = int_to_ptr.vmem [resolvable:$true] %s977
          %s979 = sshll.u32 %s976, 4
          %s980 = int_to_ptr.hbm [resolvable:$true] %s979
          %985 = dma.vmem_to_hbm [thread:$0]  %s978, 512, %s980, %s962, 256, 512, 16
        $region39: #{tpu_custom_call.1} parent=27 // pred_fallthru
          _
      $region28: #{tpu_custom_call.1} parent=5 // pred_fallthru
        _
      %p986 = scmp.le.s32.totalorder 2, %s11
      // Predicated region
      $region40: #{tpu_custom_call.1} parent=5 // pred_check
        %p987 = pneg %p986
      $region41: #{tpu_custom_call.1} parent=5 // pred_check_branch
        %989 = sbr.rel (%p987) target = $region43
      $region42: #{tpu_custom_call.1} parent=5 // pred_region
        %s990 = ssub.s32 %s11, 2
        // Predicated region
        $region44: #{tpu_custom_call.1} parent=42 // pred_check
          %p991 = pneg %p106
        $region45: #{tpu_custom_call.1} parent=42 // pred_check_branch
          %993 = sbr.rel (%p991) target = $region47
        $region46: #{tpu_custom_call.1} parent=42 // pred_region
          %s994 = sand.u32 %s91, 1
          %s995 = scalar_lea.sflag [#allocation3], %s994
          %s996 = sand.u32 %s91, 1
          %s997 = smul.addr %s996, 32
          %s998 = scalar_lea.vmem [#allocation2], %s997
          %1000 = dma.done %s995, 512
        $region47: #{tpu_custom_call.1} parent=42 // pred_fallthru
          _
      $region43: #{tpu_custom_call.1} parent=5 // pred_fallthru
        _
    $region6: #{tpu_custom_call.1} parent=1 // loop_footer
      %s15 = sadd.s32 1, %s11
    $region7: #{tpu_custom_call.1} parent=1 // loop_footer_branch
      %10 = sbr.rel target = $region3
    $region8: #{tpu_custom_call.1} parent=1 // loop_exit
      _
    %1001 = vsyncpa [#allocation3], 1
    %s1002 = scalar_lea.sflag [#allocation3], 1
    %1003 = vsyncpa %s1002, 1

</llo_original>
